<compile_context>
chip_gen: v7x
topology: tpu7x:2x2x1
jax: 0.10.0
libtpu: 0.0.40
codegen_flags: <defaults>
</compile_context>

<pallas_src>
import functools

import jax
import jax.numpy as jnp
from jax import lax
from jax.experimental import pallas as pl
from jax.experimental.pallas import tpu as pltpu


def _infonce_kernel(q_ref, qinv_ref, pos_ref, neg_ref, ninv_ref, out_ref,
                    m_sc, l_sc, *, n_actual, n_tile, mask_cols):
    k = pl.program_id(1)
    nk = pl.num_programs(1)

    # ---- seed the online logsumexp with the positive logit (class 0) ----
    @pl.when(k == 0)
    def _():
        m_sc[...] = pos_ref[...]
        l_sc[...] = jnp.ones(l_sc.shape, jnp.float32)

    # ---- streamed negatives: raw-dtype MXU matmul (q @ neg^T); normalization
    #      deferred to a row (1/||q||) x col ((1/||n||)/T) broadcast scaling ----
    logits = lax.dot_general(
        q_ref[...], neg_ref[...],
        dimension_numbers=(((1,), (1,)), ((), ())),
        preferred_element_type=jnp.float32)                  # (b_tile, n_tile)
    logits = logits * qinv_ref[...] * ninv_ref[...]

    def lse_update(lg):
        m_prev = m_sc[...]
        m_new = jnp.maximum(m_prev, jnp.max(lg, axis=1, keepdims=True))
        l_sc[...] = (l_sc[...] * jnp.exp(m_prev - m_new)
                     + jnp.sum(jnp.exp(lg - m_new), axis=1, keepdims=True))
        m_sc[...] = m_new

    if mask_cols:
        # Padded negative columns only live in the very last N tile: pay the
        # select only there, with a (1, n_tile) iota (not a full-tile iota).
        @pl.when(k == nk - 1)
        def _():
            col = k * n_tile + lax.broadcasted_iota(jnp.int32, (1, n_tile), 1)
            lse_update(jnp.where(col < n_actual, logits, jnp.float32(-1e30)))

        @pl.when(k != nk - 1)
        def _():
            lse_update(logits)
    else:
        lse_update(logits)

    # ---- finalize: per-row cross-entropy loss (target = class 0) ----
    @pl.when(k == nk - 1)
    def _():
        out_ref[...] = m_sc[...] + jnp.log(l_sc[...]) - pos_ref[...]


def _round_up(x, m):
    return (x + m - 1) // m * m


def infonce_loss(queries, positives, negatives, temperature=1.0,
                 b_tile_max=None, n_tile_max=1024):
    """InfoNCE loss (mean CE with the positive at class index 0)."""
    B, D = queries.shape
    N, _ = negatives.shape
    itemsize = jnp.dtype(queries.dtype).itemsize
    inv_t = jnp.float32(1.0 / temperature)
    eps2 = jnp.float32(1e-24)   # (F.normalize eps = 1e-12) ** 2 clamp on sum-of-squares

    # --- wrapper prologue (O((B+N)*D), fused by XLA): inverse norms and the
    #     positive logit; 1/T folded into the negatives' column scale & pos ---
    qf = queries.astype(jnp.float32)
    pf = positives.astype(jnp.float32)
    q_inv = lax.rsqrt(jnp.maximum(jnp.sum(qf * qf, axis=1, keepdims=True), eps2))   # (B, 1)
    p_inv = lax.rsqrt(jnp.maximum(jnp.sum(pf * pf, axis=1, keepdims=True), eps2))
    pos = jnp.sum(qf * pf, axis=1, keepdims=True) * q_inv * p_inv * inv_t            # (B, 1)
    nf = negatives.astype(jnp.float32)
    n_inv_t = (lax.rsqrt(jnp.maximum(jnp.sum(nf * nf, axis=1), eps2))
               * inv_t)[None, :]                                                     # (1, N)

    # --- device-aware VMEM budget ---
    try:
        vmem_cap = int(pltpu.get_tpu_info().vmem_capacity_bytes)
    except Exception:  # conservative fallback if the query is unavailable
        vmem_cap = 64 * 1024 * 1024
    vmem_budget = int(vmem_cap * 0.75)

    # --- N tile (streamed reduction axis, last in the grid) ---
    n_cap = max(8, vmem_budget // (4 * D * itemsize))   # keep dbl-buffered neg tile <= ~half budget
    if N <= min(n_tile_max, n_cap):
        n_tile, N_pad = N, N
    else:
        n_tile = max(128, (min(n_tile_max, n_cap) // 128) * 128)
        N_pad = _round_up(N, n_tile)
    num_n = N_pad // n_tile
    mask_cols = N_pad != N

    # --- B tile: as large as the remaining VMEM allows. Negatives HBM traffic
    #     is num_b * N * D, so ideally num_b == 1 (stream negatives once). ---
    neg_bytes = 2 * n_tile * D * itemsize + 2 * n_tile * 4
    bytes_per_b_row = (2 * D * itemsize      # double-buffered q tile row
                       + 8 * n_tile          # ~two f32 (b, n) temporaries
                       + 64)                 # qinv/pos/out/m/l slivers
    b_cap = max(8, (vmem_budget - neg_bytes) // bytes_per_b_row)
    if b_tile_max is not None:
        b_cap = min(b_cap, max(8, b_tile_max))
    B_pad8 = _round_up(B, 8)
    if B_pad8 <= b_cap:
        b_tile, B_pad = B_pad8, B_pad8
    else:
        b_tile = (b_cap // 128) * 128 if b_cap >= 128 else (b_cap // 8) * 8
        B_pad = _round_up(B, b_tile)
    num_b = B_pad // b_tile
    # TODO(synk): for v7x small-B/large-N, also split the N axis across the 2
    # TensorCores (per-core partial (m, l) merged in the wrapper) so a single
    # B tile does not leave one core idle.

    # --- pad inputs to the tiled extents (padded rows/cols are harmless:
    #     padded B rows are sliced off before the mean; padded N columns are
    #     masked to -1e30 in the last tile) ---
    q = queries
    if B_pad != B:
        q = jnp.pad(q, ((0, B_pad - B), (0, 0)))
        q_inv = jnp.pad(q_inv, ((0, B_pad - B), (0, 0)))
        pos = jnp.pad(pos, ((0, B_pad - B), (0, 0)))
    neg = negatives
    if N_pad != N:
        neg = jnp.pad(neg, ((0, N_pad - N), (0, 0)))
        n_inv_t = jnp.pad(n_inv_t, ((0, 0), (0, N_pad - N)))

    kernel = functools.partial(
        _infonce_kernel, n_actual=N, n_tile=n_tile, mask_cols=mask_cols)

    vmem_need = (2 * b_tile * D * itemsize + neg_bytes
                 + 8 * b_tile * n_tile + 40 * b_tile)
    vmem_limit = int(min(max(2 * vmem_need, 32 * 1024 * 1024),
                         int(vmem_cap * 0.8)))

    cost = pl.CostEstimate(
        flops=int(2 * B_pad * N_pad * D            # MXU matmul
                  + 6 * B_pad * N_pad),            # scaling + online lse
        transcendentals=int(B_pad * N_pad + 2 * B_pad),
        bytes_accessed=int((num_b * N_pad * D + B_pad * D) * itemsize
                           + 4 * (N_pad + 4 * B_pad)),
    )

    per_row = pl.pallas_call(
        kernel,
        out_shape=jax.ShapeDtypeStruct((B_pad, 1), jnp.float32),
        grid_spec=pltpu.PrefetchScalarGridSpec(
            num_scalar_prefetch=0,
            grid=(num_b, num_n),                     # N (reduction) axis last
            in_specs=[
                pl.BlockSpec((b_tile, D), lambda i, k: (i, 0)),   # queries
                pl.BlockSpec((b_tile, 1), lambda i, k: (i, 0)),   # 1/||q||
                pl.BlockSpec((b_tile, 1), lambda i, k: (i, 0)),   # pos logit (already /T)
                pl.BlockSpec((n_tile, D), lambda i, k: (k, 0)),   # negatives (N, D)
                pl.BlockSpec((1, n_tile), lambda i, k: (0, k)),   # (1/||n||)/T
            ],
            out_specs=pl.BlockSpec((b_tile, 1), lambda i, k: (i, 0)),
            scratch_shapes=[
                pltpu.VMEM((b_tile, 1), jnp.float32),   # running max m
                pltpu.VMEM((b_tile, 1), jnp.float32),   # running sum(exp) l
            ]),
        compiler_params=pltpu.CompilerParams(
            dimension_semantics=("parallel", "arbitrary"),
            vmem_limit_bytes=vmem_limit),
        cost_estimate=cost,
    )(q, q_inv, pos, neg, n_inv_t)

    # drop padded rows, mean over the real batch
    return jnp.sum(per_row[:B, 0]) / jnp.float32(B)


def infonce_loss_ref(queries, positives, negatives, temperature=1.0):
    # Pure-JAX reference mirroring the PyTorch module.
    eps = 1e-12
    norm = lambda x: x / jnp.maximum(jnp.linalg.norm(x, axis=1, keepdims=True), eps)
    q, p, n = norm(queries), norm(positives), norm(negatives)
    pos = jnp.sum(q * p, axis=1) / temperature
    neg = q @ n.T / temperature
    logits = jnp.concatenate([pos[:, None], neg], axis=1)
    lse = jax.nn.logsumexp(logits, axis=1)
    return jnp.mean(lse - logits[:, 0])


if __name__ == "__main__":
    key = jax.random.PRNGKey(0)
    kq, kp, kn = jax.random.split(key, 3)

    # Case 1: module-sized toy shapes (single tile, single grid step).
    B, D, N = 8, 32, 8
    queries = jax.random.normal(kq, (B, D), dtype=jnp.float32)
    positives = jax.random.normal(kp, (B, D), dtype=jnp.float32)
    negatives = jax.random.normal(kn, (N, D), dtype=jnp.float32)
    loss = infonce_loss(queries, positives, negatives, temperature=0.5)
    jax.block_until_ready(loss)
    ref = infonce_loss_ref(queries, positives, negatives, temperature=0.5)
    assert jnp.allclose(loss, ref, atol=2e-5, rtol=2e-5), (loss, ref)

    # Case 2: exercises the full grid -- 2 parallel B tiles x 3 streamed N
    # tiles with column padding/masking on the last negatives tile.
    B2, D2, N2 = 16, 64, 300
    q2 = jax.random.normal(kq, (B2, D2), dtype=jnp.float32)
    p2 = jax.random.normal(kp, (B2, D2), dtype=jnp.float32)
    n2 = jax.random.normal(kn, (N2, D2), dtype=jnp.float32)
    loss2 = infonce_loss(q2, p2, n2, temperature=1.0,
                         b_tile_max=8, n_tile_max=128)
    jax.block_until_ready(loss2)
    ref2 = infonce_loss_ref(q2, p2, n2, temperature=1.0)
    assert jnp.allclose(loss2, ref2, atol=2e-5, rtol=2e-5), (loss2, ref2)

    # Case 3: default, device-derived tiling -- whole batch as one B tile so
    # negatives are streamed from HBM exactly once (n_tile = 1024, 2 N steps).
    B3, D3, N3 = 64, 128, 2048
    q3 = jax.random.normal(kq, (B3, D3), dtype=jnp.float32)
    p3 = jax.random.normal(kp, (B3, D3), dtype=jnp.float32)
    n3 = jax.random.normal(kn, (N3, D3), dtype=jnp.float32)
    loss3 = infonce_loss(q3, p3, n3, temperature=0.1)
    jax.block_until_ready(loss3)
    ref3 = infonce_loss_ref(q3, p3, n3, temperature=0.1)
    assert jnp.allclose(loss3, ref3, atol=1e-4, rtol=1e-4), (loss3, ref3)

    print("KERNEL_OK")
</pallas_src>

<mosaic_0001>
module attributes {stable_mosaic.version = 11 : i64} {
  func.func @_infonce_kernel(%arg0: i32, %arg1: i32, %arg2: memref<8x32xf32, #tpu.memory_space<vmem>>, %arg3: memref<8x1xf32, #tpu.memory_space<vmem>>, %arg4: memref<8x1xf32, #tpu.memory_space<vmem>>, %arg5: memref<8x32xf32, #tpu.memory_space<vmem>>, %arg6: memref<1x8xf32, #tpu.memory_space<vmem>>, %arg7: memref<8x1xf32, #tpu.memory_space<vmem>>, %arg8: memref<8x1xf32, #tpu.memory_space<vmem>>, %arg9: memref<8x1xf32, #tpu.memory_space<vmem>>) attributes {dimension_semantics = [#tpu.dimension_semantics<parallel>, #tpu.dimension_semantics<arbitrary>], iteration_bounds = array<i64: 1, 1>, scalar_prefetch = 0 : i64, scratch_operands = 2 : i64, tpu.core_type = #tpu.core_type<tc>, window_params = [{transform_indices = @transform_0, window_bounds = array<i64: 8, 32>}, {transform_indices = @transform_1, window_bounds = array<i64: 8, 1>}, {transform_indices = @transform_2, window_bounds = array<i64: 8, 1>}, {transform_indices = @transform_3, window_bounds = array<i64: 8, 32>}, {transform_indices = @transform_4, window_bounds = array<i64: 1, 8>}, {transform_indices = @transform_5, window_bounds = array<i64: 8, 1>}]} {
    %c0_i32 = arith.constant 0 : i32
    %0 = arith.cmpi eq, %arg1, %c0_i32 : i32
    %1 = arith.extui %0 : i1 to i32
    %c0_i32_0 = arith.constant 0 : i32
    %2 = arith.cmpi ne, %1, %c0_i32_0 : i32
    scf.if %2 {
      %c0_20 = arith.constant 0 : index
      %c0_21 = arith.constant 0 : index
      %31 = vector.load %arg4[%c0_20, %c0_21] : memref<8x1xf32, #tpu.memory_space<vmem>>, vector<8x1xf32>
      %c0_22 = arith.constant 0 : index
      %c0_23 = arith.constant 0 : index
      %32 = vector.load %arg8[%c0_22, %c0_23] : memref<8x1xf32, #tpu.memory_space<vmem>>, vector<8x1xf32>
      tpu.vector_store %arg8[%c0_22, %c0_23], %31 {strides = array<i32>} : memref<8x1xf32, #tpu.memory_space<vmem>>, vector<8x1xf32>,
      %cst_24 = arith.constant 1.000000e+00 : f32
      %33 = vector.broadcast %cst_24 : f32 to vector<8x1xf32>
      %c0_25 = arith.constant 0 : index
      %c0_26 = arith.constant 0 : index
      %34 = vector.load %arg9[%c0_25, %c0_26] : memref<8x1xf32, #tpu.memory_space<vmem>>, vector<8x1xf32>
      tpu.vector_store %arg9[%c0_25, %c0_26], %33 {strides = array<i32>} : memref<8x1xf32, #tpu.memory_space<vmem>>, vector<8x1xf32>,
    } else {
    }
    %c0 = arith.constant 0 : index
    %c0_1 = arith.constant 0 : index
    %3 = vector.load %arg2[%c0, %c0_1] : memref<8x32xf32, #tpu.memory_space<vmem>>, vector<8x32xf32>
    %c0_2 = arith.constant 0 : index
    %c0_3 = arith.constant 0 : index
    %4 = vector.load %arg5[%c0_2, %c0_3] : memref<8x32xf32, #tpu.memory_space<vmem>>, vector<8x32xf32>
    %cst = arith.constant dense<0.000000e+00> : vector<8x8xf32>
    %5 = tpu.matmul %3, %4, %cst {dimension_numbers = #tpu.dot_dimension_numbers<[1], [1], [0], [0], [0, 0, 1, 0], [], []>} : vector<8x32xf32>, vector<8x32xf32>, vector<8x8xf32> -> vector<8x8xf32>
    %c0_4 = arith.constant 0 : index
    %c0_5 = arith.constant 0 : index
    %6 = vector.load %arg3[%c0_4, %c0_5] : memref<8x1xf32, #tpu.memory_space<vmem>>, vector<8x1xf32>
    %7 = vector.broadcast %6 : vector<8x1xf32> to vector<8x8xf32>
    %8 = arith.mulf %5, %7 : vector<8x8xf32>
    %c0_6 = arith.constant 0 : index
    %c0_7 = arith.constant 0 : index
    %9 = vector.load %arg6[%c0_6, %c0_7] : memref<1x8xf32, #tpu.memory_space<vmem>>, vector<1x8xf32>
    %10 = vector.broadcast %9 : vector<1x8xf32> to vector<8x8xf32>
    %11 = arith.mulf %8, %10 : vector<8x8xf32>
    %c0_8 = arith.constant 0 : index
    %c0_9 = arith.constant 0 : index
    %12 = vector.load %arg8[%c0_8, %c0_9] : memref<8x1xf32, #tpu.memory_space<vmem>>, vector<8x1xf32>
    %cst_10 = arith.constant dense<0xFF800000> : vector<8xf32>
    %13 = vector.multi_reduction <maximumf>, %11, %cst_10 [1] : vector<8x8xf32> to vector<8xf32>
    %14 = vector.shape_cast %13 : vector<8xf32> to vector<8x1xf32>
    %15 = arith.maximumf %12, %14 : vector<8x1xf32>
    %c0_11 = arith.constant 0 : index
    %c0_12 = arith.constant 0 : index
    %16 = vector.load %arg9[%c0_11, %c0_12] : memref<8x1xf32, #tpu.memory_space<vmem>>, vector<8x1xf32>
    %17 = arith.subf %12, %15 : vector<8x1xf32>
    %18 = math.exp %17 : vector<8x1xf32>
    %19 = arith.mulf %16, %18 : vector<8x1xf32>
    %20 = vector.broadcast %15 : vector<8x1xf32> to vector<8x8xf32>
    %21 = arith.subf %11, %20 : vector<8x8xf32>
    %22 = math.exp %21 : vector<8x8xf32>
    %cst_13 = arith.constant dense<0.000000e+00> : vector<8xf32>
    %23 = vector.multi_reduction <add>, %22, %cst_13 [1] : vector<8x8xf32> to vector<8xf32>
    %24 = vector.shape_cast %23 : vector<8xf32> to vector<8x1xf32>
    %25 = arith.addf %19, %24 : vector<8x1xf32>
    %c0_14 = arith.constant 0 : index
    %c0_15 = arith.constant 0 : index
    %26 = vector.load %arg9[%c0_14, %c0_15] : memref<8x1xf32, #tpu.memory_space<vmem>>, vector<8x1xf32>
    tpu.vector_store %arg9[%c0_14, %c0_15], %25 {strides = array<i32>} : memref<8x1xf32, #tpu.memory_space<vmem>>, vector<8x1xf32>,
    %c0_16 = arith.constant 0 : index
    %c0_17 = arith.constant 0 : index
    %27 = vector.load %arg8[%c0_16, %c0_17] : memref<8x1xf32, #tpu.memory_space<vmem>>, vector<8x1xf32>
    tpu.vector_store %arg8[%c0_16, %c0_17], %15 {strides = array<i32>} : memref<8x1xf32, #tpu.memory_space<vmem>>, vector<8x1xf32>,
    %c0_i32_18 = arith.constant 0 : i32
    %28 = arith.cmpi eq, %arg1, %c0_i32_18 : i32
    %29 = arith.extui %28 : i1 to i32
    %c0_i32_19 = arith.constant 0 : i32
    %30 = arith.cmpi ne, %29, %c0_i32_19 : i32
    scf.if %30 {
      %c0_20 = arith.constant 0 : index
      %c0_21 = arith.constant 0 : index
      %31 = vector.load %arg8[%c0_20, %c0_21] : memref<8x1xf32, #tpu.memory_space<vmem>>, vector<8x1xf32>
      %c0_22 = arith.constant 0 : index
      %c0_23 = arith.constant 0 : index
      %32 = vector.load %arg9[%c0_22, %c0_23] : memref<8x1xf32, #tpu.memory_space<vmem>>, vector<8x1xf32>
      %33 = math.log %32 : vector<8x1xf32>
      %34 = arith.addf %31, %33 : vector<8x1xf32>
      %c0_24 = arith.constant 0 : index
      %c0_25 = arith.constant 0 : index
      %35 = vector.load %arg4[%c0_24, %c0_25] : memref<8x1xf32, #tpu.memory_space<vmem>>, vector<8x1xf32>
      %36 = arith.subf %34, %35 : vector<8x1xf32>
      %c0_26 = arith.constant 0 : index
      %c0_27 = arith.constant 0 : index
      %37 = vector.load %arg7[%c0_26, %c0_27] : memref<8x1xf32, #tpu.memory_space<vmem>>, vector<8x1xf32>
      tpu.vector_store %arg7[%c0_26, %c0_27], %36 {strides = array<i32>} : memref<8x1xf32, #tpu.memory_space<vmem>>, vector<8x1xf32>,
    } else {
    }
    return
  }
  func.func @transform_0(%arg0: i32, %arg1: i32) -> (i32, i32) {
    %c0_i32 = arith.constant 0 : i32
    %c0_i32_0 = arith.constant 0 : i32
    return %arg0, %c0_i32 : i32, i32
  }
  func.func @transform_1(%arg0: i32, %arg1: i32) -> (i32, i32) {
    %c0_i32 = arith.constant 0 : i32
    %c0_i32_0 = arith.constant 0 : i32
    return %arg0, %c0_i32 : i32, i32
  }
  func.func @transform_2(%arg0: i32, %arg1: i32) -> (i32, i32) {
    %c0_i32 = arith.constant 0 : i32
    %c0_i32_0 = arith.constant 0 : i32
    return %arg0, %c0_i32 : i32, i32
  }
  func.func @transform_3(%arg0: i32, %arg1: i32) -> (i32, i32) {
    %c0_i32 = arith.constant 0 : i32
    %c0_i32_0 = arith.constant 0 : i32
    return %arg1, %c0_i32 : i32, i32
  }
  func.func @transform_4(%arg0: i32, %arg1: i32) -> (i32, i32) {
    %c0_i32 = arith.constant 0 : i32
    %c0_i32_0 = arith.constant 0 : i32
    return %c0_i32, %arg1 : i32, i32
  }
  func.func @transform_5(%arg0: i32, %arg1: i32) -> (i32, i32) {
    %c0_i32 = arith.constant 0 : i32
    %c0_i32_0 = arith.constant 0 : i32
    return %arg0, %c0_i32 : i32, i32
  }
}

</mosaic_0001>

<llo_original>
// kernel: tpu_custom_call.1
$region0: #{tpu_custom_call.1}
  #allocation0 [shape = 'u32[]', space=smem, size = 0x4, offset = 0x4, fixed_abs, tag = 'smem constant byte address 0x4 - core index']
  #allocation1 [shape = 'u32[144,128]{1,0:T(1,128)}', space=vmem, size = 0x12000, scoped, tag = 'internal scratch']
  #allocation2 [shape = 'f32[8,1]{1,0:T(8,128)}', space=vmem, size = 0x1000, scoped, tag = 'scratch operand']
  #allocation3 [shape = 'f32[8,1]{1,0:T(8,128)}', space=vmem, size = 0x1000, scoped, tag = 'scratch operand']
  %s0 = inlined_call_operand.vmem [shape: f32[8,32], index: 0, kind: input, shape index: {}]
  %s1 = inlined_call_operand.vmem [shape: f32[8,1], index: 1, kind: input, shape index: {}]
  %s2 = inlined_call_operand.vmem [shape: f32[8,1], index: 2, kind: input, shape index: {}]
  %s3 = inlined_call_operand.vmem [shape: f32[8,32], index: 3, kind: input, shape index: {}]
  %s4 = inlined_call_operand.vmem [shape: f32[1,8], index: 4, kind: input, shape index: {}]
  %s5 = inlined_call_operand.vmem [shape: f32[8,1], index: 5, kind: output, shape index: {}]
  %s6 = sld [smem:[#allocation0]]
  $region38: #{tpu_custom_call.1} parent=0
    _
  %s8 = ssub.s32 1, %s6
  %s9 = scalar_select 0, %s8, %s6
  // Predicated region
  $region2: #{tpu_custom_call.1} parent=0 // pred_check
    _
  $region3: #{tpu_custom_call.1} parent=0 // pred_check_branch
    %11 = sbr.rel (0) target = $region5
  $region4: #{tpu_custom_call.1} parent=0 // pred_region
    _
  $region5: #{tpu_custom_call.1} parent=0 // pred_fallthru
    _
  // Predicated region
  $region6: #{tpu_custom_call.1} parent=0 // pred_check
    _
  $region7: #{tpu_custom_call.1} parent=0 // pred_check_branch
    %13 = sbr.rel (0) target = $region9
  $region8: #{tpu_custom_call.1} parent=0 // pred_region
    _
  $region9: #{tpu_custom_call.1} parent=0 // pred_fallthru
    _
  // Predicated region
  $region10: #{tpu_custom_call.1} parent=0 // pred_check
    _
  $region11: #{tpu_custom_call.1} parent=0 // pred_check_branch
    %15 = sbr.rel (0) target = $region13
  $region12: #{tpu_custom_call.1} parent=0 // pred_region
    _
  $region13: #{tpu_custom_call.1} parent=0 // pred_fallthru
    _
  // Predicated region
  $region14: #{tpu_custom_call.1} parent=0 // pred_check
    _
  $region15: #{tpu_custom_call.1} parent=0 // pred_check_branch
    %17 = sbr.rel (0) target = $region17
  $region16: #{tpu_custom_call.1} parent=0 // pred_region
    _
  $region17: #{tpu_custom_call.1} parent=0 // pred_fallthru
    _
  // Predicated region
  $region18: #{tpu_custom_call.1} parent=0 // pred_check
    _
  $region19: #{tpu_custom_call.1} parent=0 // pred_check_branch
    %19 = sbr.rel (0) target = $region21
  $region20: #{tpu_custom_call.1} parent=0 // pred_region
    _
  $region21: #{tpu_custom_call.1} parent=0 // pred_fallthru
    _
  %p20 = scmp.eq.s32.totalorder 0, 0
  // Predicated region
  $region22: #{tpu_custom_call.1} parent=0 // pred_check
    %p21 = pneg %p20
  $region23: #{tpu_custom_call.1} parent=0 // pred_check_branch
    %23 = sbr.rel (%p21) target = $region25
  $region24: #{tpu_custom_call.1} parent=0 // pred_region
    %v24 = vld [vmem:[%s2] sm:$0xff]
    %vm25 = vcmask 7168
    %26 = vst.msk [vmem:[#allocation2] sm:$0xff] %vm25, %v24
    %27 = vst.msk [vmem:[#allocation3] sm:$0xff] %vm25, 1.0
  $region25: #{tpu_custom_call.1} parent=0 // pred_fallthru
    _
  %v28 = vld [vmem:[%s0] sm:$0xff]
  %v29 = vld [vmem:[%s3] sm:$0xff]
  %vm30 = vcmask 261120
  %v32 = vsel %vm30, %v28, 0
  %v35 = vsel %vm30, %v29, 0
  %37 = vmatprep.subr.mxu0 0.0
  %38 = vmatpush1.xpose.msra.mxu0 %v35
  %39 = vmatprep.subr.mxu0 0.0
  %40 = vmatpush1.xpose.msra.mxu0 0.0
  %41 = vmatprep.subr.mxu0 0.0
  %42 = vmatpush1.xpose.msra.mxu0 0.0
  %43 = vmatprep.subr.mxu0 0.0
  %44 = vmatpush1.xpose.msra.mxu0 0.0
  %45 = vmatprep.subr.mxu0 0.0
  %46 = vmatpush1.xpose.msra.mxu0 0.0
  %47 = vmatprep.subr.mxu0 0.0
  %48 = vmatpush1.xpose.msra.mxu0 0.0
  %49 = vmatprep.subr.mxu0 0.0
  %50 = vmatpush1.xpose.msra.mxu0 0.0
  %51 = vmatprep.subr.mxu0 0.0
  %52 = vmatpush1.xpose.msra.mxu0 0.0
  %53 = vmatprep.subr.mxu0 0.0
  %54 = vmatpush1.xpose.msra.mxu0 0.0
  %55 = vmatprep.subr.mxu0 0.0
  %56 = vmatpush1.xpose.msra.mxu0 0.0
  %57 = vmatprep.subr.mxu0 0.0
  %58 = vmatpush1.xpose.msra.mxu0 0.0
  %59 = vmatprep.subr.mxu0 0.0
  %60 = vmatpush1.xpose.msra.mxu0 0.0
  %61 = vmatprep.subr.mxu0 0.0
  %62 = vmatpush1.xpose.msra.mxu0 0.0
  %63 = vmatprep.subr.mxu0 0.0
  %64 = vmatpush1.xpose.msra.mxu0 0.0
  %65 = vmatprep.subr.mxu0 0.0
  %66 = vmatpush1.xpose.msra.mxu0 0.0
  %67 = vmatprep.subr.mxu0 0.0
  %68 = vmatpush1.xpose.msra.mxu0 0.0
  %69 = vmatprep.subr.mxu0 0.0
  %70 = vmatpush1.xpose.msra.mxu0 0.0
  %71 = vmatprep.subr.mxu0 0.0
  %72 = vmatpush1.xpose.msra.mxu0 0.0
  %73 = vmatprep.subr.mxu0 0.0
  %74 = vmatpush1.xpose.msra.mxu0 0.0
  %75 = vmatprep.subr.mxu0 0.0
  %76 = vmatpush1.xpose.msra.mxu0 0.0
  %77 = vmatprep.subr.mxu0 0.0
  %78 = vmatpush1.xpose.msra.mxu0 0.0
  %79 = vmatprep.subr.mxu0 0.0
  %80 = vmatpush1.xpose.msra.mxu0 0.0
  %81 = vmatprep.subr.mxu0 0.0
  %82 = vmatpush1.xpose.msra.mxu0 0.0
  %83 = vmatprep.subr.mxu0 0.0
  %84 = vmatpush1.xpose.msra.mxu0 0.0
  %85 = vmatprep.subr.mxu0 0.0
  %86 = vmatpush1.xpose.msra.mxu0 0.0
  %87 = vmatprep.subr.mxu0 0.0
  %88 = vmatpush1.xpose.msra.mxu0 0.0
  %89 = vmatprep.subr.mxu0 0.0
  %90 = vmatpush1.xpose.msra.mxu0 0.0
  %91 = vmatprep.subr.mxu0 0.0
  %92 = vmatpush1.xpose.msra.mxu0 0.0
  %93 = vmatprep.subr.mxu0 0.0
  %94 = vmatpush1.xpose.msra.mxu0 0.0
  %95 = vmatprep.subr.mxu0 0.0
  %96 = vmatpush1.xpose.msra.mxu0 0.0
  %97 = vmatprep.subr.mxu0 0.0
  %98 = vmatpush1.xpose.msra.mxu0 0.0
  %99 = vmatprep.subr.mxu0 0.0
  %100 = vmatpush1.xpose.msra.mxu0 0.0
  %101 = vmatprep.mubr.f32.mxu0 0.0
  %102 = vmatmul.mubr.f32.gmra.mrb[0].mxu0 %v32
  %v103 = vpop.f32.mrb[0].mxu0
  %v104 = vadd.f32 0.0, %v103
  %v105 = vpop.f32.mrb[0].mxu0
  %106 = vdwg.mxu0
  %v107 = vld [vmem:[%s1] sm:$0xff]
  %109 = vset.pattern.permute.xlu0 0
  %110 = vperm.xlu0 %109, %v107
  %v111 = vpop.permute.xlu0 %110
  %v113 = vmul.f32 %v104, %v111
  %v114 = vld [vmem:[%s4] sm:$0x1]
  %v116 = vlaneseq
  %v117 = vshrl.u32 %v116, 7
  %v118 = vsub.s32 0, %v117
  %v119 = vrot.slane %v114, %v118
  %v121 = vmul.f32 %v113, %v119
  %v122 = vld [vmem:[#allocation2] sm:$0xff]
  %vm123 = vcmask 64512
  %v124 = vsel %vm123, %v121, -inf
  %125 = vmax.xlane.f32.xlu0 %v124
  %v126 = vpop.xlane.xlu0 %125
  %v127 = vmax.f32 %v122, %v126
  %v128 = vld [vmem:[#allocation3] sm:$0xff]
  %v129 = vsub.f32 %v122, %v127
  %v130 = vmul.f32 %v129, 1.442695
  %v131 = vpow.pop %v130
  %v132 = vmul.f32 %v128, %v131
  %134 = vset.pattern.permute.xlu0 0
  %135 = vperm.xlu0 %134, %v127
  %v136 = vpop.permute.xlu0 %135
  %v138 = vsub.f32 %v121, %v136
  %v139 = vmul.f32 %v138, 1.442695
  %v140 = vpow.pop %v139
  %v141 = vsel %vm123, %v140, 0.0
  %142 = vadd.xlane.f32.xlu0 %v141
  %v143 = vpop.xlane.xlu0 %142
  %v144 = vadd.f32 %v132, %v143
  %vm145 = vcmask 7168
  %146 = vst.msk [vmem:[#allocation3] sm:$0xff] %vm145, %v144
  %147 = vst.msk [vmem:[#allocation2] sm:$0xff] %vm145, %v127
  // Predicated region
  $region26: #{tpu_custom_call.1} parent=0 // pred_check
    %p148 = pneg %p20
  $region27: #{tpu_custom_call.1} parent=0 // pred_check_branch
    %150 = sbr.rel (%p148) target = $region29
  $region28: #{tpu_custom_call.1} parent=0 // pred_region
    %v151 = vld [vmem:[#allocation2] sm:$0xff]
    %v152 = vld [vmem:[#allocation3] sm:$0xff]
    %v153 = vlog2.pop %v152
    %v154 = vmul.f32 %v153, 0.6931472
    %v155 = vadd.f32 %v151, %v154
    %v156 = vld [vmem:[%s2] sm:$0xff]
    %v157 = vsub.f32 %v155, %v156
    %158 = vst.msk [vmem:[%s5] sm:$0xff] %vm145, %v157
  $region29: #{tpu_custom_call.1} parent=0 // pred_fallthru
    _
  // Predicated region
  $region30: #{tpu_custom_call.1} parent=0 // pred_check
    _
  $region31: #{tpu_custom_call.1} parent=0 // pred_check_branch
    %160 = sbr.rel (0) target = $region33
  $region32: #{tpu_custom_call.1} parent=0 // pred_region
    _
  $region33: #{tpu_custom_call.1} parent=0 // pred_fallthru
    _
  // Predicated region
  $region34: #{tpu_custom_call.1} parent=0 // pred_check
    _
  $region35: #{tpu_custom_call.1} parent=0 // pred_check_branch
    %162 = sbr.rel (0) target = $region37
  $region36: #{tpu_custom_call.1} parent=0 // pred_region
    _
  $region37: #{tpu_custom_call.1} parent=0 // pred_fallthru
    _

</llo_original>
